<compile_context>
chip_gen: v6e
topology: v6e:2x2x1
jax: 0.10.0
libtpu: 0.0.40
codegen_flags: <defaults>
</compile_context>

<pallas_src>
import functools

import numpy as np
import jax
import jax.numpy as jnp
from jax import lax
from jax.experimental import pallas as pl
from jax.experimental.pallas import tpu as pltpu


def _e1_conv_kernel(x_ref, w_ref, b_ref, o_ref, *, H, kh_offsets, NB):
    """Masked 3x3 conv for NB images as one MXU matmul.

    x_ref: (NB, H+2, W*Cin)   zero-padded (top+bottom) NHWC row slabs
    w_ref: (K, W*Cout)        K-concatenated shifted block weights
    b_ref: (1, W*Cout)        bias tiled over W (NHWC order)
    o_ref: (NB, H, W*Cout)    lane-dense output slab (NHWC order)
    """
    per_image = []
    for b in range(NB):  # NB is a small compile-time constant
        # K-concatenate the kh-shifted row windows (static slices); the kw
        # shift is already baked into w_ref's block structure.
        per_image.append(jnp.concatenate(
            [x_ref[b, pl.ds(kh, H), :] for kh in kh_offsets], axis=-1))
    lhs = per_image[0] if NB == 1 else jnp.concatenate(per_image, axis=0)   # (NB*H, K)
    acc = jnp.dot(lhs, w_ref[...], preferred_element_type=jnp.float32)      # (NB*H, W*Cout)
    acc = acc + b_ref[...].astype(jnp.float32)
    o_ref[...] = acc.reshape(o_ref.shape).astype(o_ref.dtype)


def make_e1_forward(weight, bias, mask, *, H, W, nb=1):
    """Precompute static weight structure once; return a jitted NCHW forward."""
    Cout, Cin, KH, KW = weight.shape
    assert (KH, KW) == (3, 3)
    WCin, WCout = W * Cin, W * Cout

    mask_np = np.asarray(jax.device_get(mask), dtype=np.float32)
    w_masked = weight * jnp.asarray(mask_np)[None, None, :, :]     # (Cout,Cin,3,3)

    # Active kernel rows derived from the mask (not hard-coded): kernel rows
    # whose mask row is entirely zero contribute exactly zero and are skipped.
    kh_offsets = tuple(int(kh) for kh in range(3) if mask_np[kh].any())
    assert kh_offsets, "all-zero mask not supported"
    # TODO(synk): an all-zero mask degenerates to a broadcast bias; not needed for E1.

    # Per active kernel row kh, fold every surviving horizontal tap kw into a
    # single shifted block weight: input column a contributes to output column
    # b = a - (kw - 1), i.e. placement matrix eye(W, k=1-kw). Out-of-range
    # columns fall off the matrix, which exactly reproduces the zero W-padding.
    blocks = []
    for kh in kh_offsets:
        blk = jnp.zeros((WCin, WCout), dtype=weight.dtype)
        for kw in range(3):
            if mask_np[kh, kw] == 0.0:
                continue
            place = jnp.eye(W, k=1 - kw, dtype=weight.dtype)                 # (W, W)
            tap = jnp.transpose(w_masked[:, :, kh, kw], (1, 0))              # (Cin, Cout)
            blk = blk + jnp.einsum("ab,io->aibo", place, tap).reshape(WCin, WCout)
        blocks.append(blk)
    w_cat = jnp.concatenate(blocks, axis=0)              # (K, W*Cout), K = len(kh)*W*Cin
    b_row = jnp.tile(bias, W).reshape(1, WCout)          # NHWC-order bias row
    K = int(w_cat.shape[0])

    # W*Cout == 128 here -> unmasked full-width vst; other W/Cout combos still
    # run correctly but degrade to masked stores (perf only).

    vmem_limit = 32 * 1024 * 1024
    per_step_bytes = 4 * (2 * nb * (H + 2) * WCin        # double-buffered input blocks
                          + K * WCout + WCout            # weight + bias (resident once)
                          + 2 * nb * H * WCout)          # double-buffered output blocks
    assert per_step_bytes < vmem_limit, (
        "block-weight scheme outgrew VMEM; tile W/Cout instead")
    # TODO(synk): add a Cout/W-tiled fallback once W*Cin exceeds ~1-2K (v7x VMEM cliff).

    kernel = functools.partial(_e1_conv_kernel, H=H, kh_offsets=kh_offsets, NB=nb)

    @jax.jit
    def forward(x_nchw):
        N = x_nchw.shape[0]
        assert N % nb == 0
        # NCHW -> NHWC, 1-row zero halo top+bottom, flatten (W, Cin) onto the
        # lane axis. Stays inside this jit so it fuses into a single pass.
        x_nhwc = jnp.transpose(x_nchw, (0, 2, 3, 1))                  # (N,H,W,Cin)
        x_pad = jnp.pad(x_nhwc, ((0, 0), (1, 1), (0, 0), (0, 0)))     # (N,H+2,W,Cin)
        x2d = x_pad.reshape(N, H + 2, WCin)

        out = pl.pallas_call(
            kernel,
            out_shape=jax.ShapeDtypeStruct((N, H, WCout), x_nchw.dtype),
            grid_spec=pl.GridSpec(
                grid=(N // nb,),
                in_specs=[
                    # nb padded images per grid step
                    pl.BlockSpec((nb, H + 2, WCin), lambda n: (n, 0, 0)),
                    # constant across the grid -> DMA'd once
                    pl.BlockSpec((K, WCout), lambda n: (0, 0)),
                    pl.BlockSpec((1, WCout), lambda n: (0, 0)),
                ],
                out_specs=pl.BlockSpec((nb, H, WCout), lambda n: (n, 0, 0)),
            ),
            compiler_params=pltpu.CompilerParams(
                dimension_semantics=("parallel",),
                vmem_limit_bytes=vmem_limit),
        )(x2d, w_cat, b_row)

        # NHWC slab -> NCHW inside the same jit (fuses with the epilogue).
        # TODO(synk): emitting NHWC at the API boundary would drop this pass,
        # but the module contract is NCHW.
        return jnp.transpose(out.reshape(N, H, W, Cout), (0, 3, 1, 2))

    return forward


if __name__ == "__main__":
    # Deterministic setup consistent with E1(in_ch=4, out_ch=8).
    N, Cin, Cout, H, W = 2, 4, 8, 16, 16

    key = jax.random.PRNGKey(0)
    kx, kw_key, kb = jax.random.split(key, 3)
    x = jax.random.normal(kx, (N, Cin, H, W), dtype=jnp.float32)
    weight = jax.random.normal(kw_key, (Cout, Cin, 3, 3), dtype=jnp.float32) * 0.1
    bias = jax.random.normal(kb, (Cout,), dtype=jnp.float32) * 0.1
    mask = jnp.array([[0, 1, 1], [0, 0, 1], [0, 0, 0]], dtype=jnp.float32)

    # nb=1 -> grid of 2 steps so both v7x TensorCores get an image; raise nb to
    # amortize per-step overhead at larger batch sizes.
    forward = make_e1_forward(weight, bias, mask, H=H, W=W, nb=1)
    y = jax.block_until_ready(forward(x))

    # Reference: masked conv via XLA, same semantics as the PyTorch module.
    w_masked = weight * mask[None, None, :, :]
    y_ref = lax.conv_general_dilated(
        x, w_masked, window_strides=(1, 1), padding=((1, 1), (1, 1)),
        dimension_numbers=("NCHW", "OIHW", "NCHW"),
    ) + bias[None, :, None, None]

    assert y.shape == (N, Cout, H, W)
    assert jnp.allclose(y, y_ref, atol=1e-4, rtol=1e-4)
    print("KERNEL_OK")
</pallas_src>

<mosaic_0001>
module attributes {stable_mosaic.version = 11 : i64} {
  func.func @_e1_conv_kernel(%arg0: i32, %arg1: memref<1x18x64xf32, #tpu.memory_space<vmem>>, %arg2: memref<128x128xf32, #tpu.memory_space<vmem>>, %arg3: memref<1x128xf32, #tpu.memory_space<vmem>>, %arg4: memref<1x16x128xf32, #tpu.memory_space<vmem>>) attributes {dimension_semantics = [#tpu.dimension_semantics<parallel>], iteration_bounds = array<i64: 2>, scalar_prefetch = 0 : i64, scratch_operands = 0 : i64, tpu.core_type = #tpu.core_type<tc>, window_params = [{transform_indices = @transform_0, window_bounds = array<i64: 1, 18, 64>}, {pipeline_mode = #tpu.pipeline_mode<synchronous>, transform_indices = @transform_1, window_bounds = array<i64: 128, 128>}, {pipeline_mode = #tpu.pipeline_mode<synchronous>, transform_indices = @transform_2, window_bounds = array<i64: 1, 128>}, {transform_indices = @transform_3, window_bounds = array<i64: 1, 16, 128>}]} {
    %c0 = arith.constant 0 : index
    %c0_0 = arith.constant 0 : index
    %c0_1 = arith.constant 0 : index
    %0 = vector.load %arg1[%c0, %c0_0, %c0_1] : memref<1x18x64xf32, #tpu.memory_space<vmem>>, vector<1x16x64xf32>
    %1 = vector.shape_cast %0 : vector<1x16x64xf32> to vector<16x64xf32>
    %c0_2 = arith.constant 0 : index
    %c1 = arith.constant 1 : index
    %c0_3 = arith.constant 0 : index
    %2 = vector.load %arg1[%c0_2, %c1, %c0_3] : memref<1x18x64xf32, #tpu.memory_space<vmem>>, vector<1x16x64xf32>
    %3 = vector.shape_cast %2 : vector<1x16x64xf32> to vector<16x64xf32>
    %4 = tpu.concatenate %1, %3 in 1 : vector<16x64xf32>, vector<16x64xf32> -> vector<16x128xf32>
    %c0_4 = arith.constant 0 : index
    %c0_5 = arith.constant 0 : index
    %5 = vector.load %arg2[%c0_4, %c0_5] : memref<128x128xf32, #tpu.memory_space<vmem>>, vector<128x128xf32>
    %cst = arith.constant dense<0.000000e+00> : vector<16x128xf32>
    %6 = tpu.matmul %4, %5, %cst {dimension_numbers = #tpu.dot_dimension_numbers<[1], [0], [0], [1], [0, 0, 1, 1], [], []>} : vector<16x128xf32>, vector<128x128xf32>, vector<16x128xf32> -> vector<16x128xf32>
    %c0_6 = arith.constant 0 : index
    %c0_7 = arith.constant 0 : index
    %7 = vector.load %arg3[%c0_6, %c0_7] : memref<1x128xf32, #tpu.memory_space<vmem>>, vector<1x128xf32>
    %8 = vector.broadcast %7 : vector<1x128xf32> to vector<16x128xf32>
    %9 = arith.addf %6, %8 : vector<16x128xf32>
    %10 = vector.shape_cast %9 : vector<16x128xf32> to vector<1x16x128xf32>
    %c0_8 = arith.constant 0 : index
    %c0_9 = arith.constant 0 : index
    %c0_10 = arith.constant 0 : index
    %11 = vector.load %arg4[%c0_8, %c0_9, %c0_10] : memref<1x16x128xf32, #tpu.memory_space<vmem>>, vector<1x16x128xf32>
    tpu.vector_store %arg4[%c0_8, %c0_9, %c0_10], %10 {strides = array<i32>} : memref<1x16x128xf32, #tpu.memory_space<vmem>>, vector<1x16x128xf32>,
    return
  }
  func.func @transform_0(%arg0: i32) -> (i32, i32, i32) {
    %c0_i32 = arith.constant 0 : i32
    %c0_i32_0 = arith.constant 0 : i32
    %c0_i32_1 = arith.constant 0 : i32
    return %arg0, %c0_i32, %c0_i32_0 : i32, i32, i32
  }
  func.func @transform_1(%arg0: i32) -> (i32, i32) {
    %c0_i32 = arith.constant 0 : i32
    %c0_i32_0 = arith.constant 0 : i32
    %c0_i32_1 = arith.constant 0 : i32
    return %c0_i32, %c0_i32_0 : i32, i32
  }
  func.func @transform_2(%arg0: i32) -> (i32, i32) {
    %c0_i32 = arith.constant 0 : i32
    %c0_i32_0 = arith.constant 0 : i32
    %c0_i32_1 = arith.constant 0 : i32
    return %c0_i32, %c0_i32_0 : i32, i32
  }
  func.func @transform_3(%arg0: i32) -> (i32, i32, i32) {
    %c0_i32 = arith.constant 0 : i32
    %c0_i32_0 = arith.constant 0 : i32
    %c0_i32_1 = arith.constant 0 : i32
    return %arg0, %c0_i32, %c0_i32_0 : i32, i32, i32
  }
}

</mosaic_0001>

<llo_original>
// kernel: forward.1
$region0: #{forward.1}
  #allocation0 [shape = 'u32[]', space=smem, size = 0x4, offset = 0x4, fixed_abs, tag = 'smem constant byte address 0x4 - core index']
  #allocation1 [shape = 'u32[144,128]{1,0:T(1,128)}', space=vmem, size = 0x12000, scoped, tag = 'internal scratch']
  %s0 = inlined_call_operand.vmem [shape: f32[2,18,64], index: 0, kind: input, shape index: {}]
  %s1 = inlined_call_operand.vmem [shape: f32[128,128], index: 1, kind: input, shape index: {}]
  %s2 = inlined_call_operand.vmem [shape: f32[1,128], index: 2, kind: input, shape index: {}]
  %s3 = inlined_call_operand.vmem [shape: f32[2,16,128], index: 3, kind: output, shape index: {}]
  %s4 = sld [smem:[#allocation0]]
  $region45: #{forward.1} parent=0
    _
  %s6 = ssub.s32 1, %s4
  %s7 = scalar_select 0, %s6, %s4
  loop: start=0, step=1, limit=4
  $region2: #{forward.1} parent=0 // loop_pre_header
    _
  $region3: #{forward.1} parent=0 // loop_header
    %s9 = sphi 0, %s13
    %p10 = scmp.ge.s32.totalorder %s9, 4
    %s19 = sphi 0, %s21
    %s22 = sphi 0, %s19
    %s23 = sphi 0, %s22
    %s39 = sphi 0, %s23
    %s43 = sphi 0, %s43
    %s45 = sphi 0, %s43
    %s46 = sphi 0, %s45
    %s60 = sphi 0, %s46
    %s64 = sphi 0, %s64
    %s66 = sphi 0, %s64
    %s67 = sphi 0, %s66
    %s81 = sphi 0, %s67
    %s87 = sphi 0, %s89
    %s90 = sphi 0, %s87
    %s91 = sphi 0, %s90
    %s107 = sphi 0, %s91
  $region4: #{forward.1} parent=0 // loop_header_branch
    %12 = sbr.rel (%p10) target = $region8
  $region5: #{forward.1} parent=0 // loop_body
    %s14 = ssub.s32 %s9, 1
    %s15 = ssub.s32 %s9, 2
    %s16 = sadd.s32 %s9, 1
    %s17 = ssub.s32 %s9, %s16
    %p18 = scmp.eq.s32.totalorder %s17, 0
    %s20 = sadd.s32 %s19, 1
    %s21 = scalar_select %p18, %s19, %s20
    %p24 = pneg %p18
    %p25 = scmp.eq.s32.totalorder %s9, 1
    %p26 = por %p24, %p25
    %p27 = scmp.ne.s32.totalorder %s19, %s22
    %p28 = scmp.eq.s32.totalorder %s9, 0
    %p29 = por %p27, %p28
    %p30 = scmp.ne.s32.totalorder %s19, %s22
    %p31 = scmp.eq.s32.totalorder %s14, 1
    %p32 = por %p30, %p31
    %p33 = scmp.ne.s32.totalorder %s22, %s23
    %p34 = scmp.eq.s32.totalorder %s14, 0
    %p35 = por %p33, %p34
    %p36 = scmp.ne.s32.totalorder %s22, %s23
    %p37 = scmp.eq.s32.totalorder %s15, 1
    %p38 = por %p36, %p37
    %p40 = scmp.ne.s32.totalorder %s23, %s39
    %p41 = scmp.eq.s32.totalorder %s15, 0
    %p42 = por %p40, %p41
    %s44 = sadd.s32 %s43, 1
    %p47 = scmp.eq.s32.totalorder %s9, 1
    %p48 = scmp.ne.s32.totalorder %s43, %s45
    %p49 = scmp.eq.s32.totalorder %s9, 0
    %p50 = por %p48, %p49
    %p51 = scmp.ne.s32.totalorder %s43, %s45
    %p52 = scmp.eq.s32.totalorder %s14, 1
    %p53 = por %p51, %p52
    %p54 = scmp.ne.s32.totalorder %s45, %s46
    %p55 = scmp.eq.s32.totalorder %s14, 0
    %p56 = por %p54, %p55
    %p57 = scmp.ne.s32.totalorder %s45, %s46
    %p58 = scmp.eq.s32.totalorder %s15, 1
    %p59 = por %p57, %p58
    %p61 = scmp.ne.s32.totalorder %s46, %s60
    %p62 = scmp.eq.s32.totalorder %s15, 0
    %p63 = por %p61, %p62
    %s65 = sadd.s32 %s64, 1
    %p68 = scmp.eq.s32.totalorder %s9, 1
    %p69 = scmp.ne.s32.totalorder %s64, %s66
    %p70 = scmp.eq.s32.totalorder %s9, 0
    %p71 = por %p69, %p70
    %p72 = scmp.ne.s32.totalorder %s64, %s66
    %p73 = scmp.eq.s32.totalorder %s14, 1
    %p74 = por %p72, %p73
    %p75 = scmp.ne.s32.totalorder %s66, %s67
    %p76 = scmp.eq.s32.totalorder %s14, 0
    %p77 = por %p75, %p76
    %p78 = scmp.ne.s32.totalorder %s66, %s67
    %p79 = scmp.eq.s32.totalorder %s15, 1
    %p80 = por %p78, %p79
    %p82 = scmp.ne.s32.totalorder %s67, %s81
    %p83 = scmp.eq.s32.totalorder %s15, 0
    %p84 = por %p82, %p83
    %s85 = ssub.s32 %s9, %s16
    %p86 = scmp.eq.s32.totalorder %s85, 0
    %s88 = sadd.s32 %s87, 1
    %s89 = scalar_select %p86, %s87, %s88
    %p92 = pneg %p86
    %p93 = scmp.eq.s32.totalorder %s9, 1
    %p94 = por %p92, %p93
    %p95 = scmp.ne.s32.totalorder %s87, %s90
    %p96 = scmp.eq.s32.totalorder %s9, 0
    %p97 = por %p95, %p96
    %p98 = scmp.ne.s32.totalorder %s87, %s90
    %p99 = scmp.eq.s32.totalorder %s14, 1
    %p100 = por %p98, %p99
    %p101 = scmp.ne.s32.totalorder %s90, %s91
    %p102 = scmp.eq.s32.totalorder %s14, 0
    %p103 = por %p101, %p102
    %p104 = scmp.ne.s32.totalorder %s90, %s91
    %p105 = scmp.eq.s32.totalorder %s15, 1
    %p106 = por %p104, %p105
    %p108 = scmp.ne.s32.totalorder %s91, %s107
    %p109 = scmp.eq.s32.totalorder %s15, 0
    %p110 = por %p108, %p109
    %p111 = scmp.le.s32.totalorder 1, %s9
    %p112 = scmp.lt.s32.totalorder %s9, 3
    %p113 = pnand %p111, %p112
    %p114 = pneg %p113
    // Predicated region
    $region9: #{forward.1} parent=5 // pred_check
      _
    $region10: #{forward.1} parent=5 // pred_check_branch
      %116 = sbr.rel (%p113) target = $region12
    $region11: #{forward.1} parent=5 // pred_region
      %s117 = ssub.s32 %s9, 1
      // Predicated region
      $region13: #{forward.1} parent=11 // pred_check
        %p118 = pneg %p56
      $region14: #{forward.1} parent=11 // pred_check_branch
        %120 = sbr.rel (%p118) target = $region16
      $region15: #{forward.1} parent=11 // pred_region
        _
      $region16: #{forward.1} parent=11 // pred_fallthru
        _
      // Predicated region
      $region17: #{forward.1} parent=11 // pred_check
        %p121 = pneg %p77
      $region18: #{forward.1} parent=11 // pred_check_branch
        %123 = sbr.rel (%p121) target = $region20
      $region19: #{forward.1} parent=11 // pred_region
        _
      $region20: #{forward.1} parent=11 // pred_fallthru
        _
    $region12: #{forward.1} parent=5 // pred_fallthru
      _
    %p124 = scmp.lt.s32.totalorder %s9, 2
    // Predicated region
    $region21: #{forward.1} parent=5 // pred_check
      %p125 = pneg %p124
    $region22: #{forward.1} parent=5 // pred_check_branch
      %127 = sbr.rel (%p125) target = $region24
    $region23: #{forward.1} parent=5 // pred_region
      // Predicated region
      $region25: #{forward.1} parent=23 // pred_check
        %p128 = pneg %p29
      $region26: #{forward.1} parent=23 // pred_check_branch
        %130 = sbr.rel (%p128) target = $region28
      $region27: #{forward.1} parent=23 // pred_region
        %p131 = scmp.lt.s32.totalorder %s9, 1
        %s132 = scalar_select %p131, %s9, 1
        %s133 = smul.addr %s132, 3
        %s134 = smul.addr %s133, 8
        %s135 = scalar_lea.vmem %s0, %s134
      $region28: #{forward.1} parent=23 // pred_fallthru
        _
    $region24: #{forward.1} parent=5 // pred_fallthru
      _
    %p136 = scmp.le.s32.totalorder 1, %s9
    %p137 = scmp.lt.s32.totalorder %s9, 3
    %p138 = pnand %p136, %p137
    %p139 = pneg %p138
    // Predicated region
    $region29: #{forward.1} parent=5 // pred_check
      _
    $region30: #{forward.1} parent=5 // pred_check_branch
      %141 = sbr.rel (%p138) target = $region32
    $region31: #{forward.1} parent=5 // pred_region
      %s142 = ssub.s32 %s9, 1
      %p143 = scmp.lt.s32.totalorder %s14, 1
      %s144 = scalar_select %p143, %s14, 1
      %s145 = smul.addr %s144, 3
      %s146 = smul.addr %s145, 8
      %s147 = scalar_lea.vmem %s0, %s146
      %p148 = pneg %p35
      %p149 = pneg %p32
      %p150 = pneg %p56
      %p151 = pneg %p53
      %p152 = pneg %p77
      %p153 = pneg %p74
      %p154 = pneg %p103
      %p155 = pneg %p100
      %p156 = scmp.lt.s32.totalorder %s14, 1
      %s157 = scalar_select %p156, %s14, 1
      %s158 = smul.addr %s157, 2
      %s159 = smul.addr %s158, 8
      %s160 = scalar_lea.vmem %s3, %s159
      %p161 = scmp.lt.s32.totalorder %s14, 1
      %s162 = scalar_select %p161, %s14, 1
      %s163 = smul.addr %s162, 3
      %s164 = smul.addr %s163, 8
      %s165 = scalar_lea.vmem %s0, %s164
      %p166 = scmp.lt.s32.totalorder %s14, 1
      %s167 = scalar_select %p166, %s14, 1
      %s168 = smul.addr %s167, 2
      %s169 = smul.addr %s168, 8
      %s170 = scalar_lea.vmem %s3, %s169
      %v171 = vld [vmem:[%s165] sm:$0xff]
      %v172 = vld [vmem:[%s165 + $0x8] sm:$0xff]
      %v173 = vld [vmem:[%s165 + $0x1] sm:$0xff]
      %v174 = vld [vmem:[%s165 + $0x9] sm:$0xff]
      %177 = vrot.lane.b32.xlu0 %v173, 64
      %v178 = vpop.permute.xlu0 %177
      %179 = vrot.lane.b32.xlu0 %v174, 64
      %v180 = vpop.permute.xlu0 %179
      %vm183 = vcmask 523264
      %v184 = vsel %vm183, %v171, %v178
      %v185 = vsel %vm183, %v172, %v180
      %v186 = vld [vmem:[%s1] sm:$0xff]
      %v187 = vld [vmem:[%s1 + $0x8] sm:$0xff]
      %v188 = vld [vmem:[%s1 + $0x10] sm:$0xff]
      %v189 = vld [vmem:[%s1 + $0x18] sm:$0xff]
      %v190 = vld [vmem:[%s1 + $0x20] sm:$0xff]
      %v191 = vld [vmem:[%s1 + $0x28] sm:$0xff]
      %v192 = vld [vmem:[%s1 + $0x30] sm:$0xff]
      %v193 = vld [vmem:[%s1 + $0x38] sm:$0xff]
      %v194 = vld [vmem:[%s1 + $0x40] sm:$0xff]
      %v195 = vld [vmem:[%s1 + $0x48] sm:$0xff]
      %v196 = vld [vmem:[%s1 + $0x50] sm:$0xff]
      %v197 = vld [vmem:[%s1 + $0x58] sm:$0xff]
      %v198 = vld [vmem:[%s1 + $0x60] sm:$0xff]
      %v199 = vld [vmem:[%s1 + $0x68] sm:$0xff]
      %v200 = vld [vmem:[%s1 + $0x70] sm:$0xff]
      %v201 = vld [vmem:[%s1 + $0x78] sm:$0xff]
      %v202 = vld [vmem:[%s2] sm:$0x1]
      %v204 = vlaneseq
      %v205 = vshrl.u32 %v204, 7
      %v206 = vsub.s32 0, %v205
      %v207 = vrot.slane %v202, %v206
      %209 = vmatprep.subr.mxu0 0.0
      %210 = vmatpush1.msra.mxu0 %v201
      %211 = vmatprep.subr.mxu0 0.0
      %212 = vmatpush1.msra.mxu0 %v200
      %213 = vmatprep.subr.mxu0 0.0
      %214 = vmatpush1.msra.mxu0 %v199
      %215 = vmatprep.subr.mxu0 0.0
      %216 = vmatpush1.msra.mxu0 %v198
      %217 = vmatprep.subr.mxu0 0.0
      %218 = vmatpush1.msra.mxu0 %v197
      %219 = vmatprep.subr.mxu0 0.0
      %220 = vmatpush1.msra.mxu0 %v196
      %221 = vmatprep.subr.mxu0 0.0
      %222 = vmatpush1.msra.mxu0 %v195
      %223 = vmatprep.subr.mxu0 0.0
      %224 = vmatpush1.msra.mxu0 %v194
      %225 = vmatprep.subr.mxu0 0.0
      %226 = vmatpush1.msra.mxu0 %v193
      %227 = vmatprep.subr.mxu0 0.0
      %228 = vmatpush1.msra.mxu0 %v192
      %229 = vmatprep.subr.mxu0 0.0
      %230 = vmatpush1.msra.mxu0 %v191
      %231 = vmatprep.subr.mxu0 0.0
      %232 = vmatpush1.msra.mxu0 %v190
      %233 = vmatprep.subr.mxu0 0.0
      %234 = vmatpush1.msra.mxu0 %v189
      %235 = vmatprep.subr.mxu0 0.0
      %236 = vmatpush1.msra.mxu0 %v188
      %237 = vmatprep.subr.mxu0 0.0
      %238 = vmatpush1.msra.mxu0 %v187
      %239 = vmatprep.subr.mxu0 0.0
      %240 = vmatpush1.msra.mxu0 %v186
      %241 = vmatprep.subr.mxu0 0.0
      %242 = vmatpush2.msra.mxu0 0.0
      %243 = vmatprep.subr.mxu0 0.0
      %244 = vmatpush2.msra.mxu0 0.0
      %245 = vmatprep.subr.mxu0 0.0
      %246 = vmatpush2.msra.mxu0 0.0
      %247 = vmatprep.subr.mxu0 0.0
      %248 = vmatpush2.msra.mxu0 0.0
      %249 = vmatprep.subr.mxu0 0.0
      %250 = vmatpush2.msra.mxu0 0.0
      %251 = vmatprep.subr.mxu0 0.0
      %252 = vmatpush2.msra.mxu0 0.0
      %253 = vmatprep.subr.mxu0 0.0
      %254 = vmatpush2.msra.mxu0 0.0
      %255 = vmatprep.subr.mxu0 0.0
      %256 = vmatpush2.msra.mxu0 0.0
      %257 = vmatprep.subr.mxu0 0.0
      %258 = vmatpush2.msra.mxu0 0.0
      %259 = vmatprep.subr.mxu0 0.0
      %260 = vmatpush2.msra.mxu0 0.0
      %261 = vmatprep.subr.mxu0 0.0
      %262 = vmatpush2.msra.mxu0 0.0
      %263 = vmatprep.subr.mxu0 0.0
      %264 = vmatpush2.msra.mxu0 0.0
      %265 = vmatprep.subr.mxu0 0.0
      %266 = vmatpush2.msra.mxu0 0.0
      %267 = vmatprep.subr.mxu0 0.0
      %268 = vmatpush2.msra.mxu0 0.0
      %269 = vmatprep.subr.mxu0 0.0
      %270 = vmatpush2.msra.mxu0 0.0
      %271 = vmatprep.subr.mxu0 0.0
      %272 = vmatpush2.msra.mxu0 0.0
      %273 = vmatprep.mubr.f32.mxu0 0.0
      %274 = vmatmul.mubr.f32.gmra.mxu0 %v184
      %v275 = vpop.f32.mrf.mxu0
      %v276 = vadd.f32 %v207, %v275
      %v277 = vpop.f32.mrf.mxu0
      %278 = vmatprep.mubr.f32.mxu0 0.0
      %279 = vmatmul.mubr.f32.gmra.mxu0 %v185
      %v280 = vpop.f32.mrf.mxu0
      %v281 = vadd.f32 %v207, %v280
      %v282 = vpop.f32.mrf.mxu0
      %283 = vdwg.mxu0
      %284 = vst [vmem:[%s170] sm:$0xff] %v276
      %285 = vst [vmem:[%s170 + $0x8] sm:$0xff] %v281
      %p286 = scmp.lt.s32.totalorder %s14, 1
      %s287 = scalar_select %p286, %s14, 1
      %s288 = smul.addr %s287, 2
      %s289 = smul.addr %s288, 8
      %s290 = scalar_lea.vmem %s3, %s289
      // Predicated region
      $region33: #{forward.1} parent=31 // pred_check
        %p291 = pneg %p100
      $region34: #{forward.1} parent=31 // pred_check_branch
        %293 = sbr.rel (%p291) target = $region36
      $region35: #{forward.1} parent=31 // pred_region
        _
      $region36: #{forward.1} parent=31 // pred_fallthru
        _
    $region32: #{forward.1} parent=5 // pred_fallthru
      _
    %p294 = scmp.le.s32.totalorder 2, %s9
    // Predicated region
    $region37: #{forward.1} parent=5 // pred_check
      %p295 = pneg %p294
    $region38: #{forward.1} parent=5 // pred_check_branch
      %297 = sbr.rel (%p295) target = $region40
    $region39: #{forward.1} parent=5 // pred_region
      %s298 = ssub.s32 %s9, 2
      // Predicated region
      $region41: #{forward.1} parent=39 // pred_check
        %p299 = pneg %p106
      $region42: #{forward.1} parent=39 // pred_check_branch
        %301 = sbr.rel (%p299) target = $region44
      $region43: #{forward.1} parent=39 // pred_region
        %p302 = scmp.lt.s32.totalorder %s15, 1
        %s303 = scalar_select %p302, %s15, 1
        %s304 = smul.addr %s303, 2
        %s305 = smul.addr %s304, 8
        %s306 = scalar_lea.vmem %s3, %s305
      $region44: #{forward.1} parent=39 // pred_fallthru
        _
    $region40: #{forward.1} parent=5 // pred_fallthru
      _
  $region6: #{forward.1} parent=0 // loop_footer
    %s13 = sadd.s32 1, %s9
  $region7: #{forward.1} parent=0 // loop_footer_branch
    %8 = sbr.rel target = $region3
  $region8: #{forward.1} parent=0 // loop_exit
    _

</llo_original>
